<compile_context>
chip_gen: v7x
topology: tpu7x:2x2x1
jax: 0.10.0
libtpu: 0.0.40
codegen_flags: <defaults>
</compile_context>

<pallas_src>
import jax
import jax.numpy as jnp
import numpy as np
from jax.experimental import pallas as pl
from jax.experimental.pallas import tpu as pltpu


def hsoft_kernel(xw_ref, wpath_ref, code_ref, mask_ref, out_ref):
    # xw_ref:    [tile_b, E]  f32   (one batch tile, E = full embedding dim)
    # wpath_ref: [Lp, E]      f32   (gathered + zero-padded path weight rows)
    # code_ref:  [1, Lp]      f32   (huffman codes, zero-padded)
    # mask_ref:  [1, Lp]      f32   (1 for real path nodes, 0 for padding)
    # out_ref:   [tile_b, 1]  f32   (per-row summed path loss)
    #
    # One MXU matmul contracting E on both operands (no .T -> no XLU relayout):
    #   z[b, l] = sum_e xw[b, e] * W_path[l, e]
    z = jax.lax.dot_general(
        xw_ref[...], wpath_ref[...],
        dimension_numbers=(((1,), (1,)), ((), ())),
        preferred_element_type=jnp.float32,
    )                                                   # [tile_b, Lp]

    code = code_ref[...]                                # [1, Lp]
    mask = mask_ref[...]                                # [1, Lp]

    # Stable BCE-with-logits: code*z - softplus(z), masked on padded columns.
    softplus = jnp.maximum(z, 0.0) + jnp.log1p(jnp.exp(-jnp.abs(z)))
    loss = code * z - mask * softplus                   # [tile_b, Lp]

    # Fused path reduction (XLU slot, free here) -> tiny [tile_b, 1] store.
    out_ref[...] = jnp.sum(loss, axis=-1, keepdims=True)


def _round_up(x, m):
    return (x + m - 1) // m * m


def _pick_tile_b(B):
    """Batch tile: full-extent single tile for small B (no padding needed),
    two parallel tiles for moderate aligned B (v7x 2-TC), 512-row tiles for
    large B (amortizes ~0.35us/step grid overhead, ~85%+ of HBM roofline)."""
    if B <= 512:
        if B >= 256 and B % 16 == 0:
            return B // 2                 # >= 2 parallel tiles, still mult of 8
        return B                          # single full-extent tile, grid=(1,)
    return 512                            # multiple of 8; pad B up to it


def hiearch_soft(xw, weights, h_code, h_path):
    """xw: [B, E] f32, weights: [nnodes, E] f32, h_code/h_path: [L] int32.

    Returns the summed path loss [B, 1] (same as the PyTorch module)."""
    B, E = xw.shape
    L = int(h_path.shape[0])

    xw = xw.astype(jnp.float32)

    # Gather the path's weight rows once (tiny: L rows of E).
    w_path = weights[h_path].astype(jnp.float32)        # [L, E]

    # Path axis padded to one lane-width (128); keeps the MXU output / loss
    # tail lane-aligned.  W_path/code/mask copies are tiny.
    Lp = _round_up(max(L, 128), 128)
    w_p = jnp.zeros((Lp, E), jnp.float32).at[:L, :].set(w_path)
    code_p = jnp.zeros((1, Lp), jnp.float32).at[0, :L].set(h_code.astype(jnp.float32))
    mask_p = jnp.zeros((1, Lp), jnp.float32).at[0, :L].set(1.0)

    # Batch tiling: pad B only when needed (never copy-pad the E axis).
    tile_b = _pick_tile_b(B)
    Bp = _round_up(B, tile_b)
    xw_in = xw if Bp == B else jnp.pad(xw, ((0, Bp - B), (0, 0)))

    out = pl.pallas_call(
        hsoft_kernel,
        out_shape=jax.ShapeDtypeStruct((Bp, 1), jnp.float32),
        grid=(Bp // tile_b,),
        in_specs=[
            pl.BlockSpec((tile_b, E), lambda i: (i, 0)),   # xw batch tile
            pl.BlockSpec((Lp, E), lambda i: (0, 0)),       # path weights (resident)
            pl.BlockSpec((1, Lp), lambda i: (0, 0)),        # codes (resident)
            pl.BlockSpec((1, Lp), lambda i: (0, 0)),        # validity mask (resident)
        ],
        out_specs=pl.BlockSpec((tile_b, 1), lambda i: (i, 0)),
        compiler_params=pltpu.CompilerParams(
            dimension_semantics=("parallel",),              # batch tiles shard across TCs
        ),
    )(xw_in, w_p, code_p, mask_p)

    # Drop padded batch rows (padded path columns are already masked in-kernel).
    return out[:B]


if __name__ == "__main__":
    nnodes = 5
    n_embs = 32
    batch = 2
    path_len = 4

    key = jax.random.PRNGKey(0)
    k_w, k_x = jax.random.split(key)

    # One [1, n_embs] weight per Linear, stacked into W[nnodes, n_embs]
    # (row j == self.seqs[j].weight).
    W = 0.1 * jax.random.normal(k_w, (nnodes, n_embs), dtype=jnp.float32)
    xw = jax.random.normal(k_x, (batch, n_embs), dtype=jnp.float32)

    h_path = jnp.array([0, 2, 3, 1], dtype=jnp.int32)   # node indices along the huffman path
    h_code = jnp.array([1, 0, 1, 1], dtype=jnp.int32)   # 0/1 huffman codes

    out = hiearch_soft(xw, W, h_code, h_path)
    out = jax.block_until_ready(out)

    # Pure-JAX reference with the ORIGINAL PyTorch formulation.
    z_ref = xw @ W[h_path].T                              # [B, L]
    sig = jax.nn.sigmoid(z_ref)
    code_f = h_code.astype(jnp.float32)[None, :]
    p_ref = code_f * jnp.log(sig) + (1.0 - code_f) * jnp.log(1.0 - sig)
    ref = jnp.sum(p_ref, axis=-1, keepdims=True)          # [B, 1]

    np.testing.assert_allclose(np.asarray(out), np.asarray(ref), rtol=1e-5, atol=1e-5)
    print("KERNEL_OK")
</pallas_src>

<mosaic_0001>
module attributes {stable_mosaic.version = 11 : i64} {
  func.func @hsoft_kernel(%arg0: i32, %arg1: memref<2x32xf32, #tpu.memory_space<vmem>>, %arg2: memref<128x32xf32, #tpu.memory_space<vmem>>, %arg3: memref<1x128xf32, #tpu.memory_space<vmem>>, %arg4: memref<1x128xf32, #tpu.memory_space<vmem>>, %arg5: memref<2x1xf32, #tpu.memory_space<vmem>>) attributes {dimension_semantics = [#tpu.dimension_semantics<parallel>], iteration_bounds = array<i64: 1>, scalar_prefetch = 0 : i64, scratch_operands = 0 : i64, tpu.core_type = #tpu.core_type<tc>, window_params = [{transform_indices = @transform_0, window_bounds = array<i64: 2, 32>}, {pipeline_mode = #tpu.pipeline_mode<synchronous>, transform_indices = @transform_1, window_bounds = array<i64: 128, 32>}, {pipeline_mode = #tpu.pipeline_mode<synchronous>, transform_indices = @transform_2, window_bounds = array<i64: 1, 128>}, {pipeline_mode = #tpu.pipeline_mode<synchronous>, transform_indices = @transform_3, window_bounds = array<i64: 1, 128>}, {transform_indices = @transform_4, window_bounds = array<i64: 2, 1>}]} {
    %c0 = arith.constant 0 : index
    %c0_0 = arith.constant 0 : index
    %0 = vector.load %arg1[%c0, %c0_0] : memref<2x32xf32, #tpu.memory_space<vmem>>, vector<2x32xf32>
    %c0_1 = arith.constant 0 : index
    %c0_2 = arith.constant 0 : index
    %1 = vector.load %arg2[%c0_1, %c0_2] : memref<128x32xf32, #tpu.memory_space<vmem>>, vector<128x32xf32>
    %cst = arith.constant dense<0.000000e+00> : vector<2x128xf32>
    %2 = tpu.matmul %0, %1, %cst {dimension_numbers = #tpu.dot_dimension_numbers<[1], [1], [0], [0], [0, 0, 1, 0], [], []>} : vector<2x32xf32>, vector<128x32xf32>, vector<2x128xf32> -> vector<2x128xf32>
    %c0_3 = arith.constant 0 : index
    %c0_4 = arith.constant 0 : index
    %3 = vector.load %arg3[%c0_3, %c0_4] : memref<1x128xf32, #tpu.memory_space<vmem>>, vector<1x128xf32>
    %c0_5 = arith.constant 0 : index
    %c0_6 = arith.constant 0 : index
    %4 = vector.load %arg4[%c0_5, %c0_6] : memref<1x128xf32, #tpu.memory_space<vmem>>, vector<1x128xf32>
    %cst_7 = arith.constant 0.000000e+00 : f32
    %5 = vector.broadcast %cst_7 : f32 to vector<2x128xf32>
    %6 = arith.maximumf %2, %5 : vector<2x128xf32>
    %7 = math.absf %2 : vector<2x128xf32>
    %cst_8 = arith.constant 0.000000e+00 : f32
    %8 = vector.broadcast %cst_8 : f32 to vector<2x128xf32>
    %9 = arith.subf %8, %7 : vector<2x128xf32>
    %10 = math.exp %9 : vector<2x128xf32>
    %11 = math.log1p %10 : vector<2x128xf32>
    %12 = arith.addf %6, %11 : vector<2x128xf32>
    %13 = vector.broadcast %3 : vector<1x128xf32> to vector<2x128xf32>
    %14 = arith.mulf %13, %2 : vector<2x128xf32>
    %15 = vector.broadcast %4 : vector<1x128xf32> to vector<2x128xf32>
    %16 = arith.mulf %15, %12 : vector<2x128xf32>
    %17 = arith.subf %14, %16 : vector<2x128xf32>
    %cst_9 = arith.constant dense<0.000000e+00> : vector<2xf32>
    %18 = vector.multi_reduction <add>, %17, %cst_9 [1] : vector<2x128xf32> to vector<2xf32>
    %19 = vector.shape_cast %18 : vector<2xf32> to vector<2x1xf32>
    %c0_10 = arith.constant 0 : index
    %c0_11 = arith.constant 0 : index
    %20 = vector.load %arg5[%c0_10, %c0_11] : memref<2x1xf32, #tpu.memory_space<vmem>>, vector<2x1xf32>
    tpu.vector_store %arg5[%c0_10, %c0_11], %19 {strides = array<i32>} : memref<2x1xf32, #tpu.memory_space<vmem>>, vector<2x1xf32>,
    return
  }
  func.func @transform_0(%arg0: i32) -> (i32, i32) {
    %c0_i32 = arith.constant 0 : i32
    %c0_i32_0 = arith.constant 0 : i32
    return %arg0, %c0_i32 : i32, i32
  }
  func.func @transform_1(%arg0: i32) -> (i32, i32) {
    %c0_i32 = arith.constant 0 : i32
    %c0_i32_0 = arith.constant 0 : i32
    %c0_i32_1 = arith.constant 0 : i32
    return %c0_i32, %c0_i32_0 : i32, i32
  }
  func.func @transform_2(%arg0: i32) -> (i32, i32) {
    %c0_i32 = arith.constant 0 : i32
    %c0_i32_0 = arith.constant 0 : i32
    %c0_i32_1 = arith.constant 0 : i32
    return %c0_i32, %c0_i32_0 : i32, i32
  }
  func.func @transform_3(%arg0: i32) -> (i32, i32) {
    %c0_i32 = arith.constant 0 : i32
    %c0_i32_0 = arith.constant 0 : i32
    %c0_i32_1 = arith.constant 0 : i32
    return %c0_i32, %c0_i32_0 : i32, i32
  }
  func.func @transform_4(%arg0: i32) -> (i32, i32) {
    %c0_i32 = arith.constant 0 : i32
    %c0_i32_0 = arith.constant 0 : i32
    return %arg0, %c0_i32 : i32, i32
  }
}

</mosaic_0001>

<llo_original>
// kernel: tpu_custom_call.1
$region0: #{tpu_custom_call.1}
  #allocation0 [shape = 'u32[]', space=smem, size = 0x4, offset = 0x4, fixed_abs, tag = 'smem constant byte address 0x4 - core index']
  #allocation1 [shape = 'u32[144,128]{1,0:T(1,128)}', space=vmem, size = 0x12000, scoped, tag = 'internal scratch']
  %s0 = inlined_call_operand.vmem [shape: f32[2,32], index: 0, kind: input, shape index: {}]
  %s1 = inlined_call_operand.vmem [shape: f32[128,32], index: 1, kind: input, shape index: {}]
  %s2 = inlined_call_operand.vmem [shape: f32[1,128], index: 2, kind: input, shape index: {}]
  %s3 = inlined_call_operand.vmem [shape: f32[1,128], index: 3, kind: input, shape index: {}]
  %s4 = inlined_call_operand.vmem [shape: f32[2,1], index: 4, kind: output, shape index: {}]
  %s5 = sld [smem:[#allocation0]]
  $region26: #{tpu_custom_call.1} parent=0
    _
  %s7 = ssub.s32 1, %s5
  %s8 = scalar_select 0, %s7, %s5
  // Predicated region
  $region2: #{tpu_custom_call.1} parent=0 // pred_check
    _
  $region3: #{tpu_custom_call.1} parent=0 // pred_check_branch
    %10 = sbr.rel (0) target = $region5
  $region4: #{tpu_custom_call.1} parent=0 // pred_region
    _
  $region5: #{tpu_custom_call.1} parent=0 // pred_fallthru
    _
  // Predicated region
  $region6: #{tpu_custom_call.1} parent=0 // pred_check
    _
  $region7: #{tpu_custom_call.1} parent=0 // pred_check_branch
    %12 = sbr.rel (0) target = $region9
  $region8: #{tpu_custom_call.1} parent=0 // pred_region
    _
  $region9: #{tpu_custom_call.1} parent=0 // pred_fallthru
    _
  // Predicated region
  $region10: #{tpu_custom_call.1} parent=0 // pred_check
    _
  $region11: #{tpu_custom_call.1} parent=0 // pred_check_branch
    %14 = sbr.rel (0) target = $region13
  $region12: #{tpu_custom_call.1} parent=0 // pred_region
    _
  $region13: #{tpu_custom_call.1} parent=0 // pred_fallthru
    _
  // Predicated region
  $region14: #{tpu_custom_call.1} parent=0 // pred_check
    _
  $region15: #{tpu_custom_call.1} parent=0 // pred_check_branch
    %16 = sbr.rel (0) target = $region17
  $region16: #{tpu_custom_call.1} parent=0 // pred_region
    _
  $region17: #{tpu_custom_call.1} parent=0 // pred_fallthru
    _
  %v17 = vld [vmem:[%s0] sm:$0x3]
  %v18 = vld [vmem:[%s1] sm:$0xff]
  %v19 = vld [vmem:[%s1 + $0x8] sm:$0xff]
  %v20 = vld [vmem:[%s1 + $0x10] sm:$0xff]
  %v21 = vld [vmem:[%s1 + $0x18] sm:$0xff]
  %v22 = vld [vmem:[%s1 + $0x20] sm:$0xff]
  %v23 = vld [vmem:[%s1 + $0x28] sm:$0xff]
  %v24 = vld [vmem:[%s1 + $0x30] sm:$0xff]
  %v25 = vld [vmem:[%s1 + $0x38] sm:$0xff]
  %v26 = vld [vmem:[%s1 + $0x40] sm:$0xff]
  %v27 = vld [vmem:[%s1 + $0x48] sm:$0xff]
  %v28 = vld [vmem:[%s1 + $0x50] sm:$0xff]
  %v29 = vld [vmem:[%s1 + $0x58] sm:$0xff]
  %v30 = vld [vmem:[%s1 + $0x60] sm:$0xff]
  %v31 = vld [vmem:[%s1 + $0x68] sm:$0xff]
  %v32 = vld [vmem:[%s1 + $0x70] sm:$0xff]
  %v33 = vld [vmem:[%s1 + $0x78] sm:$0xff]
  %vm34 = vcmask 261120
  %v36 = vsel %vm34, %v17, 0
  %v39 = vsel %vm34, %v18, 0
  %v42 = vsel %vm34, %v19, 0
  %v45 = vsel %vm34, %v20, 0
  %v48 = vsel %vm34, %v21, 0
  %v51 = vsel %vm34, %v22, 0
  %v54 = vsel %vm34, %v23, 0
  %v57 = vsel %vm34, %v24, 0
  %v60 = vsel %vm34, %v25, 0
  %v63 = vsel %vm34, %v26, 0
  %v66 = vsel %vm34, %v27, 0
  %v69 = vsel %vm34, %v28, 0
  %v72 = vsel %vm34, %v29, 0
  %v75 = vsel %vm34, %v30, 0
  %v78 = vsel %vm34, %v31, 0
  %v81 = vsel %vm34, %v32, 0
  %v84 = vsel %vm34, %v33, 0
  %86 = vmatprep.subr.mxu0 0.0
  %87 = vmatpush1.xpose.msra.mxu0 %v39
  %88 = vmatprep.subr.mxu0 0.0
  %89 = vmatpush1.xpose.msra.mxu0 %v42
  %90 = vmatprep.subr.mxu0 0.0
  %91 = vmatpush1.xpose.msra.mxu0 %v45
  %92 = vmatprep.subr.mxu0 0.0
  %93 = vmatpush1.xpose.msra.mxu0 %v48
  %94 = vmatprep.subr.mxu0 0.0
  %95 = vmatpush1.xpose.msra.mxu0 %v51
  %96 = vmatprep.subr.mxu0 0.0
  %97 = vmatpush1.xpose.msra.mxu0 %v54
  %98 = vmatprep.subr.mxu0 0.0
  %99 = vmatpush1.xpose.msra.mxu0 %v57
  %100 = vmatprep.subr.mxu0 0.0
  %101 = vmatpush1.xpose.msra.mxu0 %v60
  %102 = vmatprep.subr.mxu0 0.0
  %103 = vmatpush1.xpose.msra.mxu0 %v63
  %104 = vmatprep.subr.mxu0 0.0
  %105 = vmatpush1.xpose.msra.mxu0 %v66
  %106 = vmatprep.subr.mxu0 0.0
  %107 = vmatpush1.xpose.msra.mxu0 %v69
  %108 = vmatprep.subr.mxu0 0.0
  %109 = vmatpush1.xpose.msra.mxu0 %v72
  %110 = vmatprep.subr.mxu0 0.0
  %111 = vmatpush1.xpose.msra.mxu0 %v75
  %112 = vmatprep.subr.mxu0 0.0
  %113 = vmatpush1.xpose.msra.mxu0 %v78
  %114 = vmatprep.subr.mxu0 0.0
  %115 = vmatpush1.xpose.msra.mxu0 %v81
  %116 = vmatprep.subr.mxu0 0.0
  %117 = vmatpush1.xpose.msra.mxu0 %v84
  %118 = vmatprep.subr.mxu0 0.0
  %119 = vmatpush1.xpose.msra.mxu0 0.0
  %120 = vmatprep.subr.mxu0 0.0
  %121 = vmatpush1.xpose.msra.mxu0 0.0
  %122 = vmatprep.subr.mxu0 0.0
  %123 = vmatpush1.xpose.msra.mxu0 0.0
  %124 = vmatprep.subr.mxu0 0.0
  %125 = vmatpush1.xpose.msra.mxu0 0.0
  %126 = vmatprep.subr.mxu0 0.0
  %127 = vmatpush1.xpose.msra.mxu0 0.0
  %128 = vmatprep.subr.mxu0 0.0
  %129 = vmatpush1.xpose.msra.mxu0 0.0
  %130 = vmatprep.subr.mxu0 0.0
  %131 = vmatpush1.xpose.msra.mxu0 0.0
  %132 = vmatprep.subr.mxu0 0.0
  %133 = vmatpush1.xpose.msra.mxu0 0.0
  %134 = vmatprep.subr.mxu0 0.0
  %135 = vmatpush1.xpose.msra.mxu0 0.0
  %136 = vmatprep.subr.mxu0 0.0
  %137 = vmatpush1.xpose.msra.mxu0 0.0
  %138 = vmatprep.subr.mxu0 0.0
  %139 = vmatpush1.xpose.msra.mxu0 0.0
  %140 = vmatprep.subr.mxu0 0.0
  %141 = vmatpush1.xpose.msra.mxu0 0.0
  %142 = vmatprep.subr.mxu0 0.0
  %143 = vmatpush1.xpose.msra.mxu0 0.0
  %144 = vmatprep.subr.mxu0 0.0
  %145 = vmatpush1.xpose.msra.mxu0 0.0
  %146 = vmatprep.subr.mxu0 0.0
  %147 = vmatpush1.xpose.msra.mxu0 0.0
  %148 = vmatprep.subr.mxu0 0.0
  %149 = vmatpush1.xpose.msra.mxu0 0.0
  %150 = vmatprep.mubr.f32.mxu0 0.0
  %151 = vmatmul.mubr.f32.gmra.mrb[0].mxu0 %v36
  %v152 = vpop.f32.mrb[0].mxu0
  %v153 = vadd.f32 0.0, %v152
  %v154 = vpop.f32.mrb[0].mxu0
  %155 = vdwg.mxu0
  %v156 = vld [vmem:[%s2] sm:$0x1]
  %v157 = vld [vmem:[%s3] sm:$0x1]
  %v158 = vmax.f32 %v153, 0.0
  %v159 = vand.u32 2147483647, %v153
  %v160 = vsub.f32 0.0, %v159
  %v161 = vmul.f32 %v160, 1.442695
  %v162 = vpow.pop %v161
  %v163 = vadd.f32 %v162, 1.0
  %v164 = vlog2.pop %v163
  %v165 = vmul.f32 %v164, 0.6931472
  %v166 = vmul.f32 -0.5, %v162
  %v167 = vadd.f32 %v166, 1.0
  %v168 = vmul.f32 %v167, %v162
  %v169 = vand.u32 2147483647, %v162
  %vm170 = vcmp.lt.f32.partialorder %v169, 0.0004427343
  %v171 = vsel %vm170, %v168, %v165
  %v172 = vadd.f32 %v158, %v171
  %v174 = vlaneseq
  %v175 = vshrl.u32 %v174, 7
  %v176 = vsub.s32 0, %v175
  %v177 = vrot.slane %v156, %v176
  %v179 = vmul.f32 %v177, %v153
  %v181 = vlaneseq
  %v182 = vshrl.u32 %v181, 7
  %v183 = vsub.s32 0, %v182
  %v184 = vrot.slane %v157, %v183
  %v186 = vmul.f32 %v184, %v172
  %v187 = vsub.f32 %v179, %v186
  %vm188 = vcmask 1041408
  %v189 = vsel %vm188, %v187, 0.0
  %190 = vadd.xlane.f32.xlu0 %v189
  %v191 = vpop.xlane.xlu0 %190
  %vm192 = vcmask 1024
  %193 = vst.msk [vmem:[%s4] sm:$0x3] %vm192, %v191
  // Predicated region
  $region18: #{tpu_custom_call.1} parent=0 // pred_check
    _
  $region19: #{tpu_custom_call.1} parent=0 // pred_check_branch
    %195 = sbr.rel (0) target = $region21
  $region20: #{tpu_custom_call.1} parent=0 // pred_region
    _
  $region21: #{tpu_custom_call.1} parent=0 // pred_fallthru
    _
  // Predicated region
  $region22: #{tpu_custom_call.1} parent=0 // pred_check
    _
  $region23: #{tpu_custom_call.1} parent=0 // pred_check_branch
    %197 = sbr.rel (0) target = $region25
  $region24: #{tpu_custom_call.1} parent=0 // pred_region
    _
  $region25: #{tpu_custom_call.1} parent=0 // pred_fallthru
    _

</llo_original>
